<compile_context>
chip_gen: v7x
topology: tpu7x:2x2x1
jax: 0.10.0
libtpu: 0.0.40
codegen_flags: <defaults>
</compile_context>

<pallas_src>
import functools

import jax
import jax.numpy as jnp
import numpy as np
from jax.experimental import pallas as pl
from jax.experimental.pallas import tpu as pltpu


# ----------------------------------------------------------------------------
# Fused per-body Pallas kernel
# ----------------------------------------------------------------------------
def _fused_body_kernel(*refs, plan, n_img, h0, w0, c0):
    """Run a whole VGG body split (convs / relus / pools) in one kernel.

    refs = (x_ref, *param_refs, o_ref)
      x_ref : (N*H0, W0*C0) bf16 lane-folded NHWC activations, batch folded into rows
      per ('conv', cout, relu) op:
          band_ref (3, W*Cin, W*Cout) bf16, bias_ref (1, W*Cout) f32
      per ('pool',) op:
          rsel_ref (N*H/2, N*H) bf16, sel_ref (2, W*C, (W/2)*C) bf16
      o_ref : (N*Hout, Wout*Cout) bf16
    All intermediate activations stay as VMEM/vreg values (never touch HBM).
    """
    x_ref, o_ref = refs[0], refs[-1]
    prm = refs[1:-1]

    h, w, c = h0, w0, c0
    x = x_ref[...]                                    # (N*h, w*c) bf16
    pi = 0
    for op in plan:
        nh, k = n_img * h, w * c
        if op[0] == 'conv':
            _, cout, relu = op
            band, bias = prm[pi], prm[pi + 1]
            pi += 2
            zrow = jnp.zeros((1, k), x.dtype)
            # Row-shifted views: row r of x_up/x_dn holds x[r-1] / x[r+1].  The rows
            # that would cross an image boundary in the stacked batch are zeroed, so
            # this reproduces PyTorch's per-image zero padding exactly.
            x_up = jnp.concatenate([zrow, x[: nh - 1, :]], axis=0)
            x_dn = jnp.concatenate([x[1:, :], zrow], axis=0)
            if n_img > 1:
                rid = jax.lax.broadcasted_iota(jnp.int32, (nh, k), 0)
                loc = (rid & (h - 1)) if (h & (h - 1)) == 0 else (rid % h)
                x_up = jnp.where(loc != 0, x_up, jnp.zeros_like(x_up))
                x_dn = jnp.where(loc != h - 1, x_dn, jnp.zeros_like(x_dn))
            acc = jnp.dot(x_up, band[0], preferred_element_type=jnp.float32)
            acc = acc + jnp.dot(x, band[1], preferred_element_type=jnp.float32)
            acc = acc + jnp.dot(x_dn, band[2], preferred_element_type=jnp.float32)
            acc = acc + bias[...]                     # (1, w*cout) broadcasts over rows
            if relu:
                acc = jnp.maximum(acc, 0.0)
            x = acc.astype(o_ref.dtype)               # bf16 activation
            c = cout
        elif op[0] == 'pool':
            rsel, sel = prm[pi], prm[pi + 1]
            pi += 2
            zrow = jnp.zeros((1, k), x.dtype)
            x_dn = jnp.concatenate([x[1:, :], zrow], axis=0)
            mh = jnp.maximum(x, x_dn)                 # row r: max(x[r], x[r+1])
            # Keep the even rows of every image (0/1 selection matmul — exact
            # pass-through for bf16 values, default precision, tiny M/K).
            rows = jnp.dot(rsel[...], mh,
                           preferred_element_type=jnp.float32).astype(x.dtype)
            ev = jnp.dot(rows, sel[0], preferred_element_type=jnp.float32)
            od = jnp.dot(rows, sel[1], preferred_element_type=jnp.float32)
            x = jnp.maximum(ev, od).astype(x.dtype)
            h //= 2
            w //= 2
        elif op[0] == 'relu':                          # standalone ReLU (never fused)
            x = jnp.maximum(x, jnp.zeros_like(x))
        else:
            raise ValueError(op[0])
    o_ref[...] = x.astype(o_ref.dtype)


# ----------------------------------------------------------------------------
# One-time host-side parameter preparation (cached / done at "init")
# ----------------------------------------------------------------------------
def _band_conv_weight(w_hwio, width):
    """(3,3,Cin,Cout) -> (3, W*Cin, W*Cout) row-matmul band.

    Image-edge columns (PyTorch zero padding in the W direction) are truncated
    directly inside the band, so the kernel input needs no lane padding."""
    _, _, cin, cout = w_hwio.shape
    slabs = []
    for dy in range(3):
        slab = jnp.zeros((width * cin, width * cout), w_hwio.dtype)
        for dx in range(3):
            p = np.zeros((width, width), np.float32)
            for wo in range(width):
                wi = wo + dx - 1
                if 0 <= wi < width:
                    p[wi, wo] = 1.0
            slab = slab + jnp.kron(jnp.asarray(p, w_hwio.dtype), w_hwio[dy, dx])
        slabs.append(slab)
    return jnp.stack(slabs, axis=0)


@functools.lru_cache(maxsize=None)
def _row_select(n_img, h):
    """(N*H/2, N*H) 0/1 matrix keeping the even rows of each stacked image."""
    h2 = h // 2
    r = np.zeros((n_img * h2, n_img * h), np.float32)
    for n in range(n_img):
        for j in range(h2):
            r[n * h2 + j, n * h + 2 * j] = 1.0
    return r


@functools.lru_cache(maxsize=None)
def _col_select(width, channels):
    """(2, W*C, (W/2)*C) 0/1 lane-group selections (even / odd width positions)."""
    w2 = width // 2
    s = np.zeros((2, width * channels, w2 * channels), np.float32)
    for par in range(2):
        for pw in range(w2):
            wsrc = 2 * pw + par
            for ch in range(channels):
                s[par, wsrc * channels + ch, pw * channels + ch] = 1.0
    return s


def _build_body(layers, n_img, h, w, c, act_dtype=jnp.bfloat16):
    """Turn one nn.Sequential body split into (static plan, device params, out dims)."""
    plan, params = [], []
    i = 0
    while i < len(layers):
        kind = layers[i][0]
        if kind == 'conv':
            w_hwio, bias = layers[i][1], layers[i][2]
            cin_w, cout = w_hwio.shape[2], w_hwio.shape[3]
            if cin_w < c:                    # e.g. first layer Cin padded 3 -> 4
                w_hwio = jnp.pad(w_hwio, ((0, 0), (0, 0), (0, c - cin_w), (0, 0)))
            relu = (i + 1 < len(layers)) and layers[i + 1][0] == 'relu'
            band = _band_conv_weight(w_hwio, w).astype(act_dtype)
            btile = jnp.tile(bias, w).reshape(1, w * cout).astype(jnp.float32)
            params += [band, btile]
            plan.append(('conv', cout, relu))
            c = cout
            i += 2 if relu else 1
        elif kind == 'relu':
            plan.append(('relu',))
            i += 1
        elif kind == 'pool':
            params += [jnp.asarray(_row_select(n_img, h), act_dtype),
                       jnp.asarray(_col_select(w, c), act_dtype)]
            plan.append(('pool',))
            h //= 2
            w //= 2
            i += 1
        else:
            raise ValueError(kind)
    return tuple(plan), params, (h, w, c)


# ----------------------------------------------------------------------------
# pallas_call wrapper (one call per body split)
# ----------------------------------------------------------------------------
def _full_spec(shape):
    nd = len(shape)
    return pl.BlockSpec(shape, lambda i, _nd=nd: (0,) * _nd)


def _run_body(x2d, params, *, plan, n_img, h, w, c):
    hh, ww, cc = h, w, c
    flops = 0
    for op in plan:
        if op[0] == 'conv':
            cout = op[1]
            flops += 2 * 3 * (n_img * hh) * (ww * cc) * (ww * cout)
            cc = cout
        elif op[0] == 'pool':
            flops += 2 * (n_img * hh // 2) * (n_img * hh) * (ww * cc)
            flops += 2 * 2 * (n_img * hh // 2) * (ww * cc) * ((ww // 2) * cc)
            hh //= 2
            ww //= 2
    out_shape = (n_img * hh, ww * cc)
    nbytes = (int(x2d.size) * x2d.dtype.itemsize
              + sum(int(p.size) * p.dtype.itemsize for p in params)
              + out_shape[0] * out_shape[1] * 2)

    kern = functools.partial(_fused_body_kernel, plan=plan, n_img=n_img,
                             h0=h, w0=w, c0=c)
    return pl.pallas_call(
        kern,
        out_shape=jax.ShapeDtypeStruct(out_shape, jnp.bfloat16),
        grid=(1,),
        in_specs=[_full_spec(x2d.shape)] + [_full_spec(tuple(p.shape)) for p in params],
        out_specs=_full_spec(out_shape),
        compiler_params=pltpu.CompilerParams(dimension_semantics=("arbitrary",)),
        cost_estimate=pl.CostEstimate(flops=int(flops), transcendentals=0,
                                      bytes_accessed=int(nbytes)),
    )(x2d, *params)


def _forward_impl(x_nchw, body_params, *, plans, body_meta, n_img, h0, w0,
                  c_in, c_pad):
    x = jnp.transpose(x_nchw, (0, 2, 3, 1))                       # NHWC
    if c_pad > c_in:
        x = jnp.pad(x, ((0, 0), (0, 0), (0, 0), (0, c_pad - c_in)))
    x = x.reshape(n_img * h0, w0 * c_pad).astype(jnp.bfloat16)    # lane-folded, bf16
    h, w, c = h0, w0, c_pad
    outs = []
    for plan, params, meta in zip(plans, body_params, body_meta):
        x = _run_body(x, params, plan=plan, n_img=n_img, h=h, w=w, c=c)
        h, w, c = meta
        feat = x.reshape(n_img, h, w, c).astype(jnp.float32)
        outs.append(jnp.transpose(feat, (0, 3, 1, 2)))            # NCHW out
    return outs


# ----------------------------------------------------------------------------
# VGG feature list (matches torchvision vgg16.features layer ordering)
# ----------------------------------------------------------------------------
# VGG16 'D' config scaled down 8x so the example stays small.
VGG16_CFG = [8, 8, 'M', 16, 16, 'M', 32, 32, 32, 'M', 64, 64, 64, 'M', 64, 64, 64, 'M']


def make_vgg_features(cfg, key, in_ch=3, dtype=jnp.float32):
    """Flat list mirroring backbone.features.children():
       ('conv', w_hwio, b) / ('relu',) / ('pool',).  13 convs + 13 relus + 5 pools."""
    features = []
    c = in_ch
    for v in cfg:
        if v == 'M':
            features.append(('pool',))
        else:
            key, kw, kb = jax.random.split(key, 3)
            fan_in = 9 * c
            wgt = jax.random.normal(kw, (3, 3, c, v), dtype) * jnp.sqrt(2.0 / fan_in)
            b = jax.random.normal(kb, (v,), dtype) * 0.01
            features.append(('conv', wgt, b))
            features.append(('relu',))
            c = v
    return features


# ----------------------------------------------------------------------------
# BackboneBase_VGG equivalent
# ----------------------------------------------------------------------------
class BackboneBaseVGG:
    """NCHW in / list of NCHW feature maps out (PyTorch convention); the kernels run
    a lane-folded (N*H, W*C) bf16 layout internally, one fused kernel per body."""

    def __init__(self, features, num_channels, name, return_interm_layers):
        if return_interm_layers:
            if name == 'vgg16_bn':
                # TODO(synk): BatchNorm layers of vgg16_bn are not produced by
                # make_vgg_features; fold bn scale/shift into the conv bands to support it.
                self.bodies = [features[:13], features[13:23], features[23:33],
                               features[33:43]]
            else:  # 'vgg16'
                self.bodies = [features[:9], features[9:16], features[16:23],
                               features[23:30]]
        elif name == 'vgg16_bn':
            self.bodies = [features[:44]]
        else:  # 'vgg16'
            self.bodies = [features[:30]]
        self.num_channels = num_channels
        self.return_interm_layers = return_interm_layers
        self._cache = {}     # (N, C, H, W) -> (jitted runner, per-body params)

    def _compile(self, n, c, h, w):
        c_pad = 4 if c == 3 else c          # lane-friendly first-layer Cin
        plans, body_params, metas = [], [], []
        hh, ww, cc = h, w, c_pad
        for body in self.bodies:
            plan, params, (hh, ww, cc) = _build_body(body, n, hh, ww, cc)
            plans.append(plan)
            body_params.append(params)
            metas.append((hh, ww, cc))
        runner = jax.jit(functools.partial(
            _forward_impl, plans=tuple(plans), body_meta=tuple(metas),
            n_img=n, h0=h, w0=w, c_in=c, c_pad=c_pad))
        return runner, body_params

    def forward(self, tensor_list_nchw):
        n, c, h, w = tensor_list_nchw.shape
        key = (n, c, h, w)
        if key not in self._cache:
            self._cache[key] = self._compile(n, c, h, w)
        runner, body_params = self._cache[key]
        return runner(tensor_list_nchw, body_params)


# ----------------------------------------------------------------------------
# Self-tests: fused conv and fused pool vs plain-JAX references
# ----------------------------------------------------------------------------
def _self_test(key):
    k1, k2, k3 = jax.random.split(key, 3)
    n, h, w, c, cout = 2, 16, 16, 8, 8
    x = jax.random.normal(k1, (n, h, w, c), jnp.float32)
    wgt = jax.random.normal(k2, (3, 3, c, cout), jnp.float32) * 0.2
    b = jax.random.normal(k3, (cout,), jnp.float32) * 0.1

    x_bf = x.astype(jnp.bfloat16)
    x2d = x_bf.reshape(n * h, w * c)

    # single fused conv (+bias+ReLU) vs lax.conv reference  (bf16 MXU tolerance)
    band = _band_conv_weight(wgt, w).astype(jnp.bfloat16)
    btile = jnp.tile(b, w).reshape(1, w * cout).astype(jnp.float32)
    got = _run_body(x2d, [band, btile], plan=(('conv', cout, True),),
                    n_img=n, h=h, w=w, c=c)
    got = np.asarray(got.astype(jnp.float32).reshape(n, h, w, cout))
    ref = jax.lax.conv_general_dilated(
        x, wgt, window_strides=(1, 1), padding="SAME",
        dimension_numbers=("NHWC", "HWIO", "NHWC"))
    ref = np.asarray(jnp.maximum(ref + b, 0.0))
    np.testing.assert_allclose(got, ref, rtol=0.06, atol=0.06)

    # single fused maxpool vs reference (exact on bf16 input)
    rsel = jnp.asarray(_row_select(n, h), jnp.bfloat16)
    sel = jnp.asarray(_col_select(w, c), jnp.bfloat16)
    got_p = _run_body(x2d, [rsel, sel], plan=(('pool',),),
                      n_img=n, h=h, w=w, c=c)
    got_p = np.asarray(got_p.astype(jnp.float32).reshape(n, h // 2, w // 2, c))
    ref_p = np.asarray(x_bf.astype(jnp.float32)
                       .reshape(n, h // 2, 2, w // 2, 2, c).max(axis=(2, 4)))
    np.testing.assert_allclose(got_p, ref_p, rtol=0.0, atol=1e-6)


if __name__ == "__main__":
    key = jax.random.PRNGKey(0)
    key, kx, ktest = jax.random.split(key, 3)

    _self_test(ktest)

    # Small example: batch=2, 3 input channels, 32x32 spatial (NCHW, like PyTorch).
    x = jax.random.normal(kx, (2, 3, 32, 32), jnp.float32)

    features = make_vgg_features(VGG16_CFG, key)
    backbone = BackboneBaseVGG(features, num_channels=64, name='vgg16',
                               return_interm_layers=True)

    outs = backbone.forward(x)
    outs = jax.block_until_ready(outs)

    expected = [(2, 16, 16, 16), (2, 32, 8, 8), (2, 64, 4, 4), (2, 64, 2, 2)]
    got = [tuple(o.shape) for o in outs]
    assert got == expected, f"unexpected output shapes: {got}"
    assert all(bool(jnp.all(jnp.isfinite(o))) for o in outs)

    print("KERNEL_OK")
</pallas_src>

<mosaic_0001>
module attributes {stable_mosaic.version = 11 : i64} {
  func.func @_fused_body_kernel(%arg0: i32, %arg1: memref<32x128xbf16, #tpu.memory_space<vmem>>, %arg2: memref<3x128x128xbf16, #tpu.memory_space<vmem>>, %arg3: memref<1x128xf32, #tpu.memory_space<vmem>>, %arg4: memref<32x128xbf16, #tpu.memory_space<vmem>>) attributes {dimension_semantics = [#tpu.dimension_semantics<arbitrary>], iteration_bounds = array<i64: 1>, scalar_prefetch = 0 : i64, scratch_operands = 0 : i64, tpu.core_type = #tpu.core_type<tc>, window_params = [{pipeline_mode = #tpu.pipeline_mode<synchronous>, transform_indices = @transform_0, window_bounds = array<i64: 32, 128>}, {pipeline_mode = #tpu.pipeline_mode<synchronous>, transform_indices = @transform_1, window_bounds = array<i64: 3, 128, 128>}, {pipeline_mode = #tpu.pipeline_mode<synchronous>, transform_indices = @transform_2, window_bounds = array<i64: 1, 128>}, {pipeline_mode = #tpu.pipeline_mode<synchronous>, transform_indices = @transform_3, window_bounds = array<i64: 32, 128>}]} {
    %c0 = arith.constant 0 : index
    %c0_0 = arith.constant 0 : index
    %0 = vector.load %arg1[%c0, %c0_0] : memref<32x128xbf16, #tpu.memory_space<vmem>>, vector<32x128xbf16>
    %cst = arith.constant 0.000000e+00 : bf16
    %1 = vector.broadcast %cst : bf16 to vector<1x128xbf16>
    %2 = vector.extract_strided_slice %0 {offsets = [0, 0], sizes = [31, 128], strides = [1, 1]} : vector<32x128xbf16> to vector<31x128xbf16>
    %3 = tpu.concatenate %1, %2 in 0 : vector<1x128xbf16>, vector<31x128xbf16> -> vector<32x128xbf16>
    %4 = vector.extract_strided_slice %0 {offsets = [1, 0], sizes = [31, 128], strides = [1, 1]} : vector<32x128xbf16> to vector<31x128xbf16>
    %5 = tpu.concatenate %4, %1 in 0 : vector<31x128xbf16>, vector<1x128xbf16> -> vector<32x128xbf16>
    %6 = tpu.iota {dimensions = array<i32: 0>} : vector<32x128xi32>
    %c15_i32 = arith.constant 15 : i32
    %7 = vector.broadcast %c15_i32 : i32 to vector<32x128xi32>
    %8 = arith.andi %6, %7 : vector<32x128xi32>
    %c0_i32 = arith.constant 0 : i32
    %9 = vector.broadcast %c0_i32 : i32 to vector<32x128xi32>
    %10 = arith.cmpi ne, %8, %9 : vector<32x128xi32>
    %cst_1 = arith.constant 0.000000e+00 : bf16
    %11 = vector.broadcast %cst_1 : bf16 to vector<32x128xbf16>
    %12 = arith.select %10, %3, %11 : vector<32x128xi1>, vector<32x128xbf16>
    %c15_i32_2 = arith.constant 15 : i32
    %13 = vector.broadcast %c15_i32_2 : i32 to vector<32x128xi32>
    %14 = arith.cmpi ne, %8, %13 : vector<32x128xi32>
    %cst_3 = arith.constant 0.000000e+00 : bf16
    %15 = vector.broadcast %cst_3 : bf16 to vector<32x128xbf16>
    %16 = arith.select %14, %5, %15 : vector<32x128xi1>, vector<32x128xbf16>
    %c0_4 = arith.constant 0 : index
    %c0_5 = arith.constant 0 : index
    %c0_6 = arith.constant 0 : index
    %17 = vector.load %arg2[%c0_4, %c0_5, %c0_6] : memref<3x128x128xbf16, #tpu.memory_space<vmem>>, vector<1x128x128xbf16>
    %18 = vector.shape_cast %17 : vector<1x128x128xbf16> to vector<128x128xbf16>
    %cst_7 = arith.constant dense<0.000000e+00> : vector<32x128xf32>
    %19 = tpu.matmul %12, %18, %cst_7 {dimension_numbers = #tpu.dot_dimension_numbers<[1], [0], [0], [1], [0, 0, 1, 1], [], []>} : vector<32x128xbf16>, vector<128x128xbf16>, vector<32x128xf32> -> vector<32x128xf32>
    %c1 = arith.constant 1 : index
    %c0_8 = arith.constant 0 : index
    %c0_9 = arith.constant 0 : index
    %20 = vector.load %arg2[%c1, %c0_8, %c0_9] : memref<3x128x128xbf16, #tpu.memory_space<vmem>>, vector<1x128x128xbf16>
    %21 = vector.shape_cast %20 : vector<1x128x128xbf16> to vector<128x128xbf16>
    %cst_10 = arith.constant dense<0.000000e+00> : vector<32x128xf32>
    %22 = tpu.matmul %0, %21, %cst_10 {dimension_numbers = #tpu.dot_dimension_numbers<[1], [0], [0], [1], [0, 0, 1, 1], [], []>} : vector<32x128xbf16>, vector<128x128xbf16>, vector<32x128xf32> -> vector<32x128xf32>
    %23 = arith.addf %19, %22 : vector<32x128xf32>
    %c2 = arith.constant 2 : index
    %c0_11 = arith.constant 0 : index
    %c0_12 = arith.constant 0 : index
    %24 = vector.load %arg2[%c2, %c0_11, %c0_12] : memref<3x128x128xbf16, #tpu.memory_space<vmem>>, vector<1x128x128xbf16>
    %25 = vector.shape_cast %24 : vector<1x128x128xbf16> to vector<128x128xbf16>
    %cst_13 = arith.constant dense<0.000000e+00> : vector<32x128xf32>
    %26 = tpu.matmul %16, %25, %cst_13 {dimension_numbers = #tpu.dot_dimension_numbers<[1], [0], [0], [1], [0, 0, 1, 1], [], []>} : vector<32x128xbf16>, vector<128x128xbf16>, vector<32x128xf32> -> vector<32x128xf32>
    %27 = arith.addf %23, %26 : vector<32x128xf32>
    %c0_14 = arith.constant 0 : index
    %c0_15 = arith.constant 0 : index
    %28 = vector.load %arg3[%c0_14, %c0_15] : memref<1x128xf32, #tpu.memory_space<vmem>>, vector<1x128xf32>
    %29 = vector.broadcast %28 : vector<1x128xf32> to vector<32x128xf32>
    %30 = arith.addf %27, %29 : vector<32x128xf32>
    %cst_16 = arith.constant 0.000000e+00 : f32
    %31 = vector.broadcast %cst_16 : f32 to vector<32x128xf32>
    %32 = arith.maximumf %30, %31 : vector<32x128xf32>
    %33 = arith.truncf %32 : vector<32x128xf32> to vector<32x128xbf16>
    %c0_17 = arith.constant 0 : index
    %c0_18 = arith.constant 0 : index
    %34 = vector.load %arg4[%c0_17, %c0_18] : memref<32x128xbf16, #tpu.memory_space<vmem>>, vector<32x128xbf16>
    tpu.vector_store %arg4[%c0_17, %c0_18], %33 {strides = array<i32>} : memref<32x128xbf16, #tpu.memory_space<vmem>>, vector<32x128xbf16>,
    return
  }
  func.func @transform_0(%arg0: i32) -> (i32, i32) {
    %c0_i32 = arith.constant 0 : i32
    %c0_i32_0 = arith.constant 0 : i32
    %c0_i32_1 = arith.constant 0 : i32
    return %c0_i32, %c0_i32_0 : i32, i32
  }
  func.func @transform_1(%arg0: i32) -> (i32, i32, i32) {
    %c0_i32 = arith.constant 0 : i32
    %c0_i32_0 = arith.constant 0 : i32
    %c0_i32_1 = arith.constant 0 : i32
    %c0_i32_2 = arith.constant 0 : i32
    return %c0_i32, %c0_i32_0, %c0_i32_1 : i32, i32, i32
  }
  func.func @transform_2(%arg0: i32) -> (i32, i32) {
    %c0_i32 = arith.constant 0 : i32
    %c0_i32_0 = arith.constant 0 : i32
    %c0_i32_1 = arith.constant 0 : i32
    return %c0_i32, %c0_i32_0 : i32, i32
  }
  func.func @transform_3(%arg0: i32) -> (i32, i32) {
    %c0_i32 = arith.constant 0 : i32
    %c0_i32_0 = arith.constant 0 : i32
    %c0_i32_1 = arith.constant 0 : i32
    return %c0_i32, %c0_i32_0 : i32, i32
  }
}

</mosaic_0001>

<llo_original>
// kernel: tpu_custom_call.1
$region0: #{tpu_custom_call.1}
  #allocation0 [shape = 'u32[]', space=smem, size = 0x4, offset = 0x4, fixed_abs, tag = 'smem constant byte address 0x4 - core index']
  #allocation1 [shape = 'u32[144,128]{1,0:T(1,128)}', space=vmem, size = 0x12000, scoped, tag = 'internal scratch']
  %s0 = inlined_call_operand.hbm [shape: bf16[32,128], index: 0, kind: input, shape index: {}]
  %s1 = inlined_call_operand.hbm [shape: bf16[3,128,128], index: 1, kind: input, shape index: {}]
  %s2 = inlined_call_operand.vmem [shape: f32[1,128], index: 2, kind: input, shape index: {}]
  %s3 = inlined_call_operand.hbm [shape: bf16[32,128], index: 3, kind: output, shape index: {}]
  %s4 = sld [smem:[#allocation0]]
  $region30: #{tpu_custom_call.1} parent=0
    _
  %s6 = ssub.s32 1, %s4
  %s7 = scalar_select 0, %s6, %s4
  $region1: #{tpu_custom_call.1} parent=0
    #allocation2 [shape = 'u8[8192]{0}', space=vmem, size = 0x2000, scoped, tag = 'input window, operand 0, single buffered']
    #allocation3 [shape = 's32[1]{0}', space=sflag, size = 0x4, scoped, tag = 'scoped memory for tpu_custom_call.1']
    #allocation4 [shape = 's32[1]{0}', space=sflag, size = 0x4, scoped, tag = 'scoped memory for tpu_custom_call.1']
    #allocation5 [shape = 'u8[98304]{0}', space=vmem, size = 0x18000, scoped, tag = 'input window, operand 1, single buffered']
    #allocation6 [shape = 's32[1]{0}', space=sflag, size = 0x4, scoped, tag = 'scoped memory for tpu_custom_call.1']
    #allocation7 [shape = 'u8[8192]{0}', space=vmem, size = 0x2000, scoped, tag = 'output window, operand 0, single buffered']
    %8 = vsyncpa [#allocation3], 0
    %9 = vsyncpa [#allocation6], 0
    %10 = vsyncpa [#allocation4], 0
    // Predicated region
    $region2: #{tpu_custom_call.1} parent=1 // pred_check
      _
    $region3: #{tpu_custom_call.1} parent=1 // pred_check_branch
      %12 = sbr.rel (0) target = $region5
    $region4: #{tpu_custom_call.1} parent=1 // pred_region
      %s14 = ssub.s32 256, 256
      %15 = vsyncadd [#allocation3], %s14
      %s16 = sshll.u32 [#allocation2], 4
      %s17 = int_to_ptr.vmem [resolvable:$true] %s16
      %22 = dma.hbm_to_vmem [thread:$0]  %s0, 256, %s17, [#allocation3], 64, 64, 4
    $region5: #{tpu_custom_call.1} parent=1 // pred_fallthru
      _
    // Predicated region
    $region6: #{tpu_custom_call.1} parent=1 // pred_check
      _
    $region7: #{tpu_custom_call.1} parent=1 // pred_check_branch
      %24 = sbr.rel (0) target = $region9
    $region8: #{tpu_custom_call.1} parent=1 // pred_region
      %s26 = ssub.s32 3072, 3072
      %27 = vsyncadd [#allocation6], %s26
      %s28 = sshll.u32 [#allocation5], 4
      %s29 = int_to_ptr.vmem [resolvable:$true] %s28
      %34 = dma.hbm_to_vmem [thread:$0]  %s1, 3072, %s29, [#allocation6], 64, 64, 4
    $region9: #{tpu_custom_call.1} parent=1 // pred_fallthru
      _
    // Predicated region
    $region10: #{tpu_custom_call.1} parent=1 // pred_check
      _
    $region11: #{tpu_custom_call.1} parent=1 // pred_check_branch
      %36 = sbr.rel (0) target = $region13
    $region12: #{tpu_custom_call.1} parent=1 // pred_region
      _
    $region13: #{tpu_custom_call.1} parent=1 // pred_fallthru
      _
    // Predicated region
    $region14: #{tpu_custom_call.1} parent=1 // pred_check
      _
    $region15: #{tpu_custom_call.1} parent=1 // pred_check_branch
      %38 = sbr.rel (0) target = $region17
    $region16: #{tpu_custom_call.1} parent=1 // pred_region
      %39 = dma.done [#allocation3], 256
    $region17: #{tpu_custom_call.1} parent=1 // pred_fallthru
      _
    // Predicated region
    $region18: #{tpu_custom_call.1} parent=1 // pred_check
      _
    $region19: #{tpu_custom_call.1} parent=1 // pred_check_branch
      %41 = sbr.rel (0) target = $region21
    $region20: #{tpu_custom_call.1} parent=1 // pred_region
      %42 = dma.done [#allocation6], 3072
    $region21: #{tpu_custom_call.1} parent=1 // pred_fallthru
      _
    %v46 = vld [vmem:[#allocation2] sm:$0xf]
    %v47 = vld [vmem:[#allocation2 + $0x4] sm:$0xf]
    %v48 = vld [vmem:[#allocation2 + $0x8] sm:$0xf]
    %v49 = vld [vmem:[#allocation2 + $0xc] sm:$0xf]
    %v54 = vunpack.c.l.b16 %v46
    %v55 = vunpack.c.l.b16 %v47
    %v56 = vunpack.c.l.b16 %v48
    %v57 = vunpack.c.l.b16 %v49
    %v58 = vpack.c.b16 %v55, %v54
    %v59 = vpack.c.b16 %v57, %v56
    %vm60 = vsmask.f32 256
    %v62 = vshrl.u32 %v58, 16
    %v64 = vrot.slane %v62, 7
    %v65 = vshll.u32 %v58, 16
    %v67 = vor.u32 %v64, %v65
    %v69 = vshrl.u32 %v59, 16
    %v71 = vrot.slane %v69, 7
    %v72 = vshll.u32 %v59, 16
    %v74 = vor.u32 %v71, %v72
    %v75 = vsel %vm60, %v64, %v74
    %vm78 = vcmask 1040384
    %vm79 = vmand %vm78, %vm60
    %v80 = vsel %vm79, 0, %v67
    %vm81 = vsmask.f32 7424
    %v82 = vrot.slane %v65, 1
    %v83 = vor.u32 %v62, %v82
    %v84 = vrot.slane %v72, 1
    %v85 = vsel %vm81, %v83, %v84
    %v86 = vor.u32 %v69, %v84
    %vm89 = vcmask 1047552
    %vm90 = vmand %vm89, %vm81
    %v91 = vsel %vm90, %v86, 0
    %v92 = vlaneseq
    %v93 = vshrl.u32 %v92, 7
    %v94 = vadd.s32 %v93, 8
    %v95 = vadd.s32 %v93, 16
    %v96 = vadd.s32 %v93, 24
    %v97 = vand.u32 %v93, 15
    %v98 = vand.u32 %v94, 15
    %v99 = vand.u32 %v95, 15
    %v100 = vand.u32 %v96, 15
    %vm101 = vcmp.ne.s32.totalorder %v97, 0
    %vm102 = vcmp.ne.s32.totalorder %v98, 0
    %vm103 = vcmp.ne.s32.totalorder %v99, 0
    %vm104 = vcmp.ne.s32.totalorder %v100, 0
    %vm105 = vmpackc.low %vm101, %vm101
    %vm106 = vmpackc.low %vm102, %vm102
    %vm107 = vmpackc.low %vm103, %vm103
    %vm108 = vmpackc.low %vm104, %vm104
    %v109 = vsel %vm105, 65537, 0
    %v110 = vsel %vm106, 65537, 0
    %v111 = vsel %vm107, 65537, 0
    %v112 = vsel %vm108, 65537, 0
    %v113 = vunpack.c.l.b16 %v109
    %v114 = vunpack.c.l.b16 %v110
    %v115 = vunpack.c.l.b16 %v111
    %v116 = vunpack.c.l.b16 %v112
    %v117 = vpack.c.b16 %v114, %v113
    %v118 = vpack.c.b16 %v116, %v115
    %vm119 = vcmp.ne.s16.totalorder %v117, 0
    %vm120 = vcmp.ne.s16.totalorder %v118, 0
    %v121 = vsel %vm119, %v80, 0
    %v122 = vsel %vm120, %v75, 0
    %vm123 = vcmp.ne.s32.totalorder %v97, 15
    %vm124 = vcmp.ne.s32.totalorder %v98, 15
    %vm125 = vcmp.ne.s32.totalorder %v99, 15
    %vm126 = vcmp.ne.s32.totalorder %v100, 15
    %vm127 = vmpackc.low %vm123, %vm123
    %vm128 = vmpackc.low %vm124, %vm124
    %vm129 = vmpackc.low %vm125, %vm125
    %vm130 = vmpackc.low %vm126, %vm126
    %v131 = vsel %vm127, 65537, 0
    %v132 = vsel %vm128, 65537, 0
    %v133 = vsel %vm129, 65537, 0
    %v134 = vsel %vm130, 65537, 0
    %v135 = vunpack.c.l.b16 %v131
    %v136 = vunpack.c.l.b16 %v132
    %v137 = vunpack.c.l.b16 %v133
    %v138 = vunpack.c.l.b16 %v134
    %v139 = vpack.c.b16 %v136, %v135
    %v140 = vpack.c.b16 %v138, %v137
    %vm141 = vcmp.ne.s16.totalorder %v139, 0
    %vm142 = vcmp.ne.s16.totalorder %v140, 0
    %v143 = vsel %vm141, %v85, 0
    %v144 = vsel %vm142, %v91, 0
    %v145 = vld [vmem:[#allocation5] sm:$0xf]
    %v146 = vld [vmem:[#allocation5 + $0x4] sm:$0xf]
    %v147 = vld [vmem:[#allocation5 + $0x8] sm:$0xf]
    %v148 = vld [vmem:[#allocation5 + $0xc] sm:$0xf]
    %v149 = vld [vmem:[#allocation5 + $0x10] sm:$0xf]
    %v150 = vld [vmem:[#allocation5 + $0x14] sm:$0xf]
    %v151 = vld [vmem:[#allocation5 + $0x18] sm:$0xf]
    %v152 = vld [vmem:[#allocation5 + $0x1c] sm:$0xf]
    %v153 = vld [vmem:[#allocation5 + $0x20] sm:$0xf]
    %v154 = vld [vmem:[#allocation5 + $0x24] sm:$0xf]
    %v155 = vld [vmem:[#allocation5 + $0x28] sm:$0xf]
    %v156 = vld [vmem:[#allocation5 + $0x2c] sm:$0xf]
    %v157 = vld [vmem:[#allocation5 + $0x30] sm:$0xf]
    %v158 = vld [vmem:[#allocation5 + $0x34] sm:$0xf]
    %v159 = vld [vmem:[#allocation5 + $0x38] sm:$0xf]
    %v160 = vld [vmem:[#allocation5 + $0x3c] sm:$0xf]
    %s161 = scalar_lea.vmem [#allocation5], 64
    %v162 = vld [vmem:[%s161] sm:$0xf]
    %v163 = vld [vmem:[%s161 + $0x4] sm:$0xf]
    %v164 = vld [vmem:[%s161 + $0x8] sm:$0xf]
    %v165 = vld [vmem:[%s161 + $0xc] sm:$0xf]
    %v166 = vld [vmem:[%s161 + $0x10] sm:$0xf]
    %v167 = vld [vmem:[%s161 + $0x14] sm:$0xf]
    %v168 = vld [vmem:[%s161 + $0x18] sm:$0xf]
    %v169 = vld [vmem:[%s161 + $0x1c] sm:$0xf]
    %v170 = vld [vmem:[%s161 + $0x20] sm:$0xf]
    %v171 = vld [vmem:[%s161 + $0x24] sm:$0xf]
    %v172 = vld [vmem:[%s161 + $0x28] sm:$0xf]
    %v173 = vld [vmem:[%s161 + $0x2c] sm:$0xf]
    %v174 = vld [vmem:[%s161 + $0x30] sm:$0xf]
    %v175 = vld [vmem:[%s161 + $0x34] sm:$0xf]
    %v176 = vld [vmem:[%s161 + $0x38] sm:$0xf]
    %v177 = vld [vmem:[%s161 + $0x3c] sm:$0xf]
    %v196 = vunpack.c.l.b16 %v162
    %v197 = vunpack.c.l.b16 %v163
    %v198 = vunpack.c.l.b16 %v164
    %v199 = vunpack.c.l.b16 %v165
    %v200 = vunpack.c.l.b16 %v166
    %v201 = vunpack.c.l.b16 %v167
    %v202 = vunpack.c.l.b16 %v168
    %v203 = vunpack.c.l.b16 %v169
    %v204 = vunpack.c.l.b16 %v170
    %v205 = vunpack.c.l.b16 %v171
    %v206 = vunpack.c.l.b16 %v172
    %v207 = vunpack.c.l.b16 %v173
    %v208 = vunpack.c.l.b16 %v174
    %v209 = vunpack.c.l.b16 %v175
    %v210 = vunpack.c.l.b16 %v176
    %v211 = vunpack.c.l.b16 %v177
    %v212 = vpack.c.b16 %v197, %v196
    %v213 = vpack.c.b16 %v199, %v198
    %v214 = vpack.c.b16 %v201, %v200
    %v215 = vpack.c.b16 %v203, %v202
    %v216 = vpack.c.b16 %v205, %v204
    %v217 = vpack.c.b16 %v207, %v206
    %v218 = vpack.c.b16 %v209, %v208
    %v219 = vpack.c.b16 %v211, %v210
    %228 = vmatprep.subr.bf16.mxu0 0
    %229 = vmatpush1.bf16.msra.mxu0 %v212
    %230 = vmatprep.subr.bf16.mxu0 0
    %231 = vmatpush1.bf16.msra.mxu0 %v213
    %232 = vmatprep.subr.bf16.mxu0 0
    %233 = vmatpush1.bf16.msra.mxu0 %v214
    %234 = vmatprep.subr.bf16.mxu0 0
    %235 = vmatpush1.bf16.msra.mxu0 %v215
    %236 = vmatprep.subr.bf16.mxu0 0
    %237 = vmatpush1.bf16.msra.mxu0 %v216
    %238 = vmatprep.subr.bf16.mxu0 0
    %239 = vmatpush1.bf16.msra.mxu0 %v217
    %240 = vmatprep.subr.bf16.mxu0 0
    %241 = vmatpush1.bf16.msra.mxu0 %v218
    %242 = vmatprep.subr.bf16.mxu0 0
    %243 = vmatpush1.bf16.msra.mxu0 %v219
    %244 = vmatprep.subr.bf16.mxu0 0
    %245 = vmatpush1.bf16.msra.mxu0 0
    %246 = vmatprep.subr.bf16.mxu0 0
    %247 = vmatpush1.bf16.msra.mxu0 0
    %248 = vmatprep.subr.bf16.mxu0 0
    %249 = vmatpush1.bf16.msra.mxu0 0
    %250 = vmatprep.subr.bf16.mxu0 0
    %251 = vmatpush1.bf16.msra.mxu0 0
    %252 = vmatprep.subr.bf16.mxu0 0
    %253 = vmatpush1.bf16.msra.mxu0 0
    %254 = vmatprep.subr.bf16.mxu0 0
    %255 = vmatpush1.bf16.msra.mxu0 0
    %256 = vmatprep.subr.bf16.mxu0 0
    %257 = vmatpush1.bf16.msra.mxu0 0
    %258 = vmatprep.subr.bf16.mxu0 0
    %259 = vmatpush1.bf16.msra.mxu0 0
    %260 = vmatprep.mubr.bf16.mxu0 0
    %261 = vmatmul.mubr.bf16.gmra.mrb[0].mxu0 %v58
    %v262 = vpop.f32.mrb[0].mxu0
    %v263 = vadd.f32 0.0, %v262
    %v264 = vpop.f32.mrb[0].mxu0
    %v265 = vpop.f32.mrb[0].mxu0
    %v266 = vadd.f32 0.0, %v265
    %v267 = vpop.f32.mrb[0].mxu0
    %268 = vmatprep.mubr.bf16.mxu0 0
    %269 = vmatmul.mubr.bf16.gmra.mrb[0].mxu0 %v59
    %v270 = vpop.f32.mrb[0].mxu0
    %v271 = vadd.f32 0.0, %v270
    %v272 = vpop.f32.mrb[0].mxu0
    %v273 = vpop.f32.mrb[0].mxu0
    %v274 = vadd.f32 0.0, %v273
    %v275 = vpop.f32.mrb[0].mxu0
    %276 = vdwg.mxu0
    %v293 = vunpack.c.l.b16 %v145
    %v294 = vunpack.c.l.b16 %v146
    %v295 = vunpack.c.l.b16 %v147
    %v296 = vunpack.c.l.b16 %v148
    %v297 = vunpack.c.l.b16 %v149
    %v298 = vunpack.c.l.b16 %v150
    %v299 = vunpack.c.l.b16 %v151
    %v300 = vunpack.c.l.b16 %v152
    %v301 = vunpack.c.l.b16 %v153
    %v302 = vunpack.c.l.b16 %v154
    %v303 = vunpack.c.l.b16 %v155
    %v304 = vunpack.c.l.b16 %v156
    %v305 = vunpack.c.l.b16 %v157
    %v306 = vunpack.c.l.b16 %v158
    %v307 = vunpack.c.l.b16 %v159
    %v308 = vunpack.c.l.b16 %v160
    %v309 = vpack.c.b16 %v294, %v293
    %v310 = vpack.c.b16 %v296, %v295
    %v311 = vpack.c.b16 %v298, %v297
    %v312 = vpack.c.b16 %v300, %v299
    %v313 = vpack.c.b16 %v302, %v301
    %v314 = vpack.c.b16 %v304, %v303
    %v315 = vpack.c.b16 %v306, %v305
    %v316 = vpack.c.b16 %v308, %v307
    %325 = vmatprep.subr.bf16.mxu0 0
    %326 = vmatpush1.bf16.msra.mxu0 %v309
    %327 = vmatprep.subr.bf16.mxu0 0
    %328 = vmatpush1.bf16.msra.mxu0 %v310
    %329 = vmatprep.subr.bf16.mxu0 0
    %330 = vmatpush1.bf16.msra.mxu0 %v311
    %331 = vmatprep.subr.bf16.mxu0 0
    %332 = vmatpush1.bf16.msra.mxu0 %v312
    %333 = vmatprep.subr.bf16.mxu0 0
    %334 = vmatpush1.bf16.msra.mxu0 %v313
    %335 = vmatprep.subr.bf16.mxu0 0
    %336 = vmatpush1.bf16.msra.mxu0 %v314
    %337 = vmatprep.subr.bf16.mxu0 0
    %338 = vmatpush1.bf16.msra.mxu0 %v315
    %339 = vmatprep.subr.bf16.mxu0 0
    %340 = vmatpush1.bf16.msra.mxu0 %v316
    %341 = vmatprep.subr.bf16.mxu0 0
    %342 = vmatpush1.bf16.msra.mxu0 0
    %343 = vmatprep.subr.bf16.mxu0 0
    %344 = vmatpush1.bf16.msra.mxu0 0
    %345 = vmatprep.subr.bf16.mxu0 0
    %346 = vmatpush1.bf16.msra.mxu0 0
    %347 = vmatprep.subr.bf16.mxu0 0
    %348 = vmatpush1.bf16.msra.mxu0 0
    %349 = vmatprep.subr.bf16.mxu0 0
    %350 = vmatpush1.bf16.msra.mxu0 0
    %351 = vmatprep.subr.bf16.mxu0 0
    %352 = vmatpush1.bf16.msra.mxu0 0
    %353 = vmatprep.subr.bf16.mxu0 0
    %354 = vmatpush1.bf16.msra.mxu0 0
    %355 = vmatprep.subr.bf16.mxu0 0
    %356 = vmatpush1.bf16.msra.mxu0 0
    %357 = vmatprep.mubr.bf16.mxu0 0
    %358 = vmatmul.mubr.bf16.gmra.mrb[0].mxu0 %v121
    %v359 = vpop.f32.mrb[0].mxu0
    %v360 = vadd.f32 %v263, %v359
    %v361 = vpop.f32.mrb[0].mxu0
    %v362 = vpop.f32.mrb[0].mxu0
    %v363 = vadd.f32 %v266, %v362
    %v364 = vpop.f32.mrb[0].mxu0
    %365 = vmatprep.mubr.bf16.mxu0 0
    %366 = vmatmul.mubr.bf16.gmra.mrb[0].mxu0 %v122
    %v367 = vpop.f32.mrb[0].mxu0
    %v368 = vadd.f32 %v271, %v367
    %v369 = vpop.f32.mrb[0].mxu0
    %v370 = vpop.f32.mrb[0].mxu0
    %v371 = vadd.f32 %v274, %v370
    %v372 = vpop.f32.mrb[0].mxu0
    %373 = vdwg.mxu0
    %s374 = scalar_lea.vmem [#allocation5], 128
    %v375 = vld [vmem:[%s374] sm:$0xf]
    %v376 = vld [vmem:[%s374 + $0x4] sm:$0xf]
    %v377 = vld [vmem:[%s374 + $0x8] sm:$0xf]
    %v378 = vld [vmem:[%s374 + $0xc] sm:$0xf]
    %v379 = vld [vmem:[%s374 + $0x10] sm:$0xf]
    %v380 = vld [vmem:[%s374 + $0x14] sm:$0xf]
    %v381 = vld [vmem:[%s374 + $0x18] sm:$0xf]
    %v382 = vld [vmem:[%s374 + $0x1c] sm:$0xf]
    %v383 = vld [vmem:[%s374 + $0x20] sm:$0xf]
    %v384 = vld [vmem:[%s374 + $0x24] sm:$0xf]
    %v385 = vld [vmem:[%s374 + $0x28] sm:$0xf]
    %v386 = vld [vmem:[%s374 + $0x2c] sm:$0xf]
    %v387 = vld [vmem:[%s374 + $0x30] sm:$0xf]
    %v388 = vld [vmem:[%s374 + $0x34] sm:$0xf]
    %v389 = vld [vmem:[%s374 + $0x38] sm:$0xf]
    %v390 = vld [vmem:[%s374 + $0x3c] sm:$0xf]
    %v407 = vunpack.c.l.b16 %v375
    %v408 = vunpack.c.l.b16 %v376
    %v409 = vunpack.c.l.b16 %v377
    %v410 = vunpack.c.l.b16 %v378
    %v411 = vunpack.c.l.b16 %v379
    %v412 = vunpack.c.l.b16 %v380
    %v413 = vunpack.c.l.b16 %v381
    %v414 = vunpack.c.l.b16 %v382
    %v415 = vunpack.c.l.b16 %v383
    %v416 = vunpack.c.l.b16 %v384
    %v417 = vunpack.c.l.b16 %v385
    %v418 = vunpack.c.l.b16 %v386
    %v419 = vunpack.c.l.b16 %v387
    %v420 = vunpack.c.l.b16 %v388
    %v421 = vunpack.c.l.b16 %v389
    %v422 = vunpack.c.l.b16 %v390
    %v423 = vpack.c.b16 %v408, %v407
    %v424 = vpack.c.b16 %v410, %v409
    %v425 = vpack.c.b16 %v412, %v411
    %v426 = vpack.c.b16 %v414, %v413
    %v427 = vpack.c.b16 %v416, %v415
    %v428 = vpack.c.b16 %v418, %v417
    %v429 = vpack.c.b16 %v420, %v419
    %v430 = vpack.c.b16 %v422, %v421
    %439 = vmatprep.subr.bf16.mxu0 0
    %440 = vmatpush1.bf16.msra.mxu0 %v423
    %441 = vmatprep.subr.bf16.mxu0 0
    %442 = vmatpush1.bf16.msra.mxu0 %v424
    %443 = vmatprep.subr.bf16.mxu0 0
    %444 = vmatpush1.bf16.msra.mxu0 %v425
    %445 = vmatprep.subr.bf16.mxu0 0
    %446 = vmatpush1.bf16.msra.mxu0 %v426
    %447 = vmatprep.subr.bf16.mxu0 0
    %448 = vmatpush1.bf16.msra.mxu0 %v427
    %449 = vmatprep.subr.bf16.mxu0 0
    %450 = vmatpush1.bf16.msra.mxu0 %v428
    %451 = vmatprep.subr.bf16.mxu0 0
    %452 = vmatpush1.bf16.msra.mxu0 %v429
    %453 = vmatprep.subr.bf16.mxu0 0
    %454 = vmatpush1.bf16.msra.mxu0 %v430
    %455 = vmatprep.subr.bf16.mxu0 0
    %456 = vmatpush1.bf16.msra.mxu0 0
    %457 = vmatprep.subr.bf16.mxu0 0
    %458 = vmatpush1.bf16.msra.mxu0 0
    %459 = vmatprep.subr.bf16.mxu0 0
    %460 = vmatpush1.bf16.msra.mxu0 0
    %461 = vmatprep.subr.bf16.mxu0 0
    %462 = vmatpush1.bf16.msra.mxu0 0
    %463 = vmatprep.subr.bf16.mxu0 0
    %464 = vmatpush1.bf16.msra.mxu0 0
    %465 = vmatprep.subr.bf16.mxu0 0
    %466 = vmatpush1.bf16.msra.mxu0 0
    %467 = vmatprep.subr.bf16.mxu0 0
    %468 = vmatpush1.bf16.msra.mxu0 0
    %469 = vmatprep.subr.bf16.mxu0 0
    %470 = vmatpush1.bf16.msra.mxu0 0
    %471 = vmatprep.mubr.bf16.mxu0 0
    %472 = vmatmul.mubr.bf16.gmra.mrb[0].mxu0 %v143
    %v473 = vpop.f32.mrb[0].mxu0
    %v474 = vadd.f32 0.0, %v473
    %v475 = vpop.f32.mrb[0].mxu0
    %v476 = vpop.f32.mrb[0].mxu0
    %v477 = vadd.f32 0.0, %v476
    %v478 = vpop.f32.mrb[0].mxu0
    %479 = vmatprep.mubr.bf16.mxu0 0
    %480 = vmatmul.mubr.bf16.gmra.mrb[0].mxu0 %v144
    %v481 = vpop.f32.mrb[0].mxu0
    %v482 = vadd.f32 0.0, %v481
    %v483 = vpop.f32.mrb[0].mxu0
    %v484 = vpop.f32.mrb[0].mxu0
    %v485 = vadd.f32 0.0, %v484
    %v486 = vpop.f32.mrb[0].mxu0
    %487 = vdwg.mxu0
    %v488 = vadd.f32 %v360, %v474
    %v489 = vadd.f32 %v363, %v477
    %v490 = vadd.f32 %v368, %v482
    %v491 = vadd.f32 %v371, %v485
    %v492 = vld [vmem:[%s2] sm:$0x1]
    %v494 = vlaneseq
    %v495 = vshrl.u32 %v494, 7
    %v496 = vsub.s32 0, %v495
    %v497 = vrot.slane %v492, %v496
    %v499 = vadd.f32 %v488, %v497
    %v500 = vadd.f32 %v489, %v497
    %v501 = vadd.f32 %v490, %v497
    %v502 = vadd.f32 %v491, %v497
    %v503 = vmax.f32 %v499, 0.0
    %v504 = vmax.f32 %v500, 0.0
    %v505 = vmax.f32 %v501, 0.0
    %v506 = vmax.f32 %v502, 0.0
    %v507 = vpack.c.bf16 %v504, %v503
    %v508 = vpack.c.bf16 %v506, %v505
    %v511 = vunpack.c.l.b16 %v507
    %v512 = vunpack.c.h.b16 %v507
    %v513 = vunpack.c.l.b16 %v508
    %v514 = vunpack.c.h.b16 %v508
    %v515 = vpack.c.b16 %v511, %v511
    %v516 = vpack.c.b16 %v512, %v512
    %v517 = vpack.c.b16 %v513, %v513
    %v518 = vpack.c.b16 %v514, %v514
    %523 = vst [vmem:[#allocation7] sm:$0xf] %v515
    %524 = vst [vmem:[#allocation7 + $0x4] sm:$0xf] %v516
    %525 = vst [vmem:[#allocation7 + $0x8] sm:$0xf] %v517
    %526 = vst [vmem:[#allocation7 + $0xc] sm:$0xf] %v518
    // Predicated region
    $region22: #{tpu_custom_call.1} parent=1 // pred_check
      _
    $region23: #{tpu_custom_call.1} parent=1 // pred_check_branch
      %528 = sbr.rel (0) target = $region25
    $region24: #{tpu_custom_call.1} parent=1 // pred_region
      %s530 = ssub.s32 256, 256
      %531 = vsyncadd [#allocation4], %s530
      %s532 = sshll.u32 [#allocation7], 4
      %s533 = int_to_ptr.vmem [resolvable:$true] %s532
      %538 = dma.vmem_to_hbm [thread:$0]  %s533, 256, %s3, [#allocation4], 64, 64, 4
    $region25: #{tpu_custom_call.1} parent=1 // pred_fallthru
      _
    // Predicated region
    $region26: #{tpu_custom_call.1} parent=1 // pred_check
      _
    $region27: #{tpu_custom_call.1} parent=1 // pred_check_branch
      %540 = sbr.rel (0) target = $region29
    $region28: #{tpu_custom_call.1} parent=1 // pred_region
      %541 = dma.done [#allocation4], 256
    $region29: #{tpu_custom_call.1} parent=1 // pred_fallthru
      _
    %542 = vsyncpa [#allocation3], 1
    %543 = vsyncpa [#allocation6], 1
    %544 = vsyncpa [#allocation4], 1

</llo_original>
